<compile_context>
chip_gen: v6e
topology: v6e:2x2x1
jax: 0.10.0
libtpu: 0.0.40
codegen_flags: <defaults>
</compile_context>

<pallas_src>
import jax
import jax.numpy as jnp
from jax.experimental import pallas as pl
from jax.experimental.pallas import tpu as pltpu


# ----------------------------------------------------------------------------
# Kernel: per (batch, spatial-tile) block compute
#   s = sigmoid(W2 @ relu(W1 @ x + b1) + b2) ;  out = x * s
# with x laid out (C, T): channels on sublanes, spatial tile T on lanes.
# ----------------------------------------------------------------------------
def _ca_kernel(x_ref, w1_ref, b1_ref, w2_ref, b2_ref, o_ref):
    # x_ref : (1, C, T) f32   lane-dense spatial tile of one batch element
    # w1_ref: (Cmid, C) bf16  first 1x1 conv weight (squeeze)
    # b1_ref: (Cmid, 1) f32
    # w2_ref: (C, Cmid) bf16  second 1x1 conv weight (excite)
    # b2_ref: (C, 1)    f32
    # o_ref : (1, C, T) f32
    x = x_ref[0]                                    # (C, T) f32
    x_bf = x.astype(jnp.bfloat16)                   # bf16 operands for the MXU

    h = jnp.dot(w1_ref[...], x_bf,
                preferred_element_type=jnp.float32)  # (Cmid, T) f32 accum
    h = jnp.maximum(h + b1_ref[...], 0.0)            # bias bcast over lanes, ReLU

    s = jnp.dot(w2_ref[...], h.astype(jnp.bfloat16),
                preferred_element_type=jnp.float32)  # (C, T)
    s = s + b2_ref[...]

    # sigmoid: exp on the EUP, approx reciprocal also on the EUP (VALU stays free
    # for the bias adds and the final gating multiply).
    gate = pl.reciprocal(1.0 + jnp.exp(-s), approx=True)

    o_ref[0] = (x * gate).astype(o_ref.dtype)


def _pick_spatial_tile(hw_pad, c, n_batch):
    """Pick a lane-aligned tile dividing hw_pad (a multiple of 128).

    Caps the (C, tile) f32 block at ~2 MiB, and if the resulting grid would
    have fewer than 2 total steps, splits the spatial axis so both v7x
    TensorCores get work.
    """
    max_elems = 1 << 19                       # 512K f32 elems ~= 2 MiB per block
    cap = max(128, (max_elems // max(c, 1)) // 128 * 128)
    tile = min(hw_pad, cap)
    while hw_pad % tile != 0:                 # hw_pad % 128 == 0, so this terminates
        tile -= 128

    # Ensure >= 2 grid steps total (megacore balance on v7x).
    if n_batch * (hw_pad // tile) < 2 and hw_pad >= 256:
        t = (hw_pad // 2) // 128 * 128
        while t >= 128 and hw_pad % t != 0:
            t -= 128
        if t >= 128:
            tile = min(tile, t)
    return tile


def ca_forward(params, x_nchw):
    """CA.forward.  x: (N, C, H, W) float32  ->  (N, C, H, W) float32."""
    w1, b1, w2, b2 = params["w1"], params["b1"], params["w2"], params["b2"]
    N, C, H, W = x_nchw.shape
    Cmid = w1.shape[0]
    HW = H * W

    # Pad flattened spatial dim to a multiple of 128 -> always lane-aligned tiles.
    HW_pad = ((HW + 127) // 128) * 128
    x_f = x_nchw.reshape(N, C, HW)
    if HW_pad != HW:
        x_f = jnp.pad(x_f, ((0, 0), (0, 0), (0, HW_pad - HW)))

    tile = _pick_spatial_tile(HW_pad, C, N)
    nt = HW_pad // tile

    w1_bf = w1.astype(jnp.bfloat16)
    w2_bf = w2.astype(jnp.bfloat16)
    b1c = b1.reshape(Cmid, 1).astype(jnp.float32)
    b2c = b2.reshape(C, 1).astype(jnp.float32)

    # Deeper input pipelining only when there are enough spatial tiles for it to
    # matter (hides DMA-issue latency on v7x); VMEM budget: 3x2 + 2x2 MiB << 32 MiB.
    if nt >= 4:
        x_spec = pl.BlockSpec((1, C, tile), lambda n, t: (n, 0, t),
                              pipeline_mode=pl.Buffered(3))
    else:
        x_spec = pl.BlockSpec((1, C, tile), lambda n, t: (n, 0, t))

    out = pl.pallas_call(
        _ca_kernel,
        out_shape=jax.ShapeDtypeStruct((N, C, HW_pad), jnp.float32),
        grid_spec=pltpu.PrefetchScalarGridSpec(
            num_scalar_prefetch=0,
            grid=(N, nt),
            in_specs=[
                x_spec,
                pl.BlockSpec((Cmid, C), lambda n, t: (0, 0)),
                pl.BlockSpec((Cmid, 1), lambda n, t: (0, 0)),
                pl.BlockSpec((C, Cmid), lambda n, t: (0, 0)),
                pl.BlockSpec((C, 1), lambda n, t: (0, 0)),
            ],
            out_specs=pl.BlockSpec((1, C, tile), lambda n, t: (n, 0, t)),
        ),
        compiler_params=pltpu.CompilerParams(
            dimension_semantics=("parallel", "parallel"),
            vmem_limit_bytes=32 * 1024 * 1024),
    )(x_f, w1_bf, b1c, w2_bf, b2c)

    if HW_pad != HW:
        out = out[:, :, :HW]
    return out.reshape(N, C, H, W)


# ----------------------------------------------------------------------------
# Parameter init (deterministic, PyTorch-Conv2d-like uniform bounds)
# ----------------------------------------------------------------------------
def init_params(key, in_channels=64, reduction=8):
    c, cmid = in_channels, in_channels // reduction

    def conv_wb(k, cin, cout):
        bound = 1.0 / float(jnp.sqrt(float(cin)))   # 1x1 conv: fan_in = cin
        kw_, kb_ = jax.random.split(k)
        w = jax.random.uniform(kw_, (cout, cin), jnp.float32, -bound, bound)
        b = jax.random.uniform(kb_, (cout,), jnp.float32, -bound, bound)
        return w, b

    k1, k2 = jax.random.split(key)
    w1, b1 = conv_wb(k1, c, cmid)
    w2, b2 = conv_wb(k2, cmid, c)
    return {"w1": w1, "b1": b1, "w2": w2, "b2": b2}


# ----------------------------------------------------------------------------
# Pure-JAX f32 reference for correctness check
# ----------------------------------------------------------------------------
def ca_reference(params, x):
    w1, b1, w2, b2 = params["w1"], params["b1"], params["w2"], params["b2"]
    N, C, H, W = x.shape
    xf = x.reshape(N, C, H * W)
    h = jnp.maximum(jnp.einsum("oc,ncp->nop", w1, xf) + b1[None, :, None], 0.0)
    s = jax.nn.sigmoid(jnp.einsum("om,nmp->nop", w2, h) + b2[None, :, None])
    # TODO(synk): reference forward() computes AdaptiveAvgPool2d(1) but discards it;
    # the pooled value never affects the output, so it is omitted here.
    return (xf * s).reshape(N, C, H, W)


if __name__ == "__main__":
    key = jax.random.PRNGKey(0)
    kp, kx = jax.random.split(key)
    params = init_params(kp, in_channels=64, reduction=8)
    x = jax.random.normal(kx, (2, 64, 16, 16), jnp.float32)     # NCHW

    y = ca_forward(params, x)
    y = jax.block_until_ready(y)
    y_ref = ca_reference(params, x)

    assert y.shape == (2, 64, 16, 16)
    # Tolerance accounts for bf16 MXU operands + EUP approx reciprocal in the
    # sigmoid (reference is pure f32); drift is ~1e-2 absolute worst case.
    assert jnp.allclose(y, y_ref, rtol=5e-2, atol=5e-2)
    print("KERNEL_OK")
</pallas_src>

<mosaic_0001>
module attributes {stable_mosaic.version = 11 : i64} {
  func.func @_ca_kernel(%arg0: i32, %arg1: i32, %arg2: memref<1x64x256xf32, #tpu.memory_space<vmem>>, %arg3: memref<8x64xbf16, #tpu.memory_space<vmem>>, %arg4: memref<8x1xf32, #tpu.memory_space<vmem>>, %arg5: memref<64x8xbf16, #tpu.memory_space<vmem>>, %arg6: memref<64x1xf32, #tpu.memory_space<vmem>>, %arg7: memref<1x64x256xf32, #tpu.memory_space<vmem>>) attributes {dimension_semantics = [#tpu.dimension_semantics<parallel>, #tpu.dimension_semantics<parallel>], iteration_bounds = array<i64: 2, 1>, scalar_prefetch = 0 : i64, scratch_operands = 0 : i64, tpu.core_type = #tpu.core_type<tc>, window_params = [{transform_indices = @transform_0, window_bounds = array<i64: 1, 64, 256>}, {pipeline_mode = #tpu.pipeline_mode<synchronous>, transform_indices = @transform_1, window_bounds = array<i64: 8, 64>}, {pipeline_mode = #tpu.pipeline_mode<synchronous>, transform_indices = @transform_2, window_bounds = array<i64: 8, 1>}, {pipeline_mode = #tpu.pipeline_mode<synchronous>, transform_indices = @transform_3, window_bounds = array<i64: 64, 8>}, {pipeline_mode = #tpu.pipeline_mode<synchronous>, transform_indices = @transform_4, window_bounds = array<i64: 64, 1>}, {transform_indices = @transform_5, window_bounds = array<i64: 1, 64, 256>}]} {
    %c0 = arith.constant 0 : index
    %c0_0 = arith.constant 0 : index
    %c0_1 = arith.constant 0 : index
    %0 = vector.load %arg2[%c0, %c0_0, %c0_1] : memref<1x64x256xf32, #tpu.memory_space<vmem>>, vector<1x64x256xf32>
    %1 = vector.shape_cast %0 : vector<1x64x256xf32> to vector<64x256xf32>
    %2 = arith.truncf %1 : vector<64x256xf32> to vector<64x256xbf16>
    %c0_2 = arith.constant 0 : index
    %c0_3 = arith.constant 0 : index
    %3 = vector.load %arg3[%c0_2, %c0_3] : memref<8x64xbf16, #tpu.memory_space<vmem>>, vector<8x64xbf16>
    %cst = arith.constant dense<0.000000e+00> : vector<8x256xf32>
    %4 = tpu.matmul %3, %2, %cst {dimension_numbers = #tpu.dot_dimension_numbers<[1], [0], [0], [1], [0, 0, 1, 1], [], []>} : vector<8x64xbf16>, vector<64x256xbf16>, vector<8x256xf32> -> vector<8x256xf32>
    %c0_4 = arith.constant 0 : index
    %c0_5 = arith.constant 0 : index
    %5 = vector.load %arg4[%c0_4, %c0_5] : memref<8x1xf32, #tpu.memory_space<vmem>>, vector<8x1xf32>
    %6 = vector.broadcast %5 : vector<8x1xf32> to vector<8x256xf32>
    %7 = arith.addf %4, %6 : vector<8x256xf32>
    %cst_6 = arith.constant 0.000000e+00 : f32
    %8 = vector.broadcast %cst_6 : f32 to vector<8x256xf32>
    %9 = arith.maximumf %7, %8 : vector<8x256xf32>
    %c0_7 = arith.constant 0 : index
    %c0_8 = arith.constant 0 : index
    %10 = vector.load %arg5[%c0_7, %c0_8] : memref<64x8xbf16, #tpu.memory_space<vmem>>, vector<64x8xbf16>
    %11 = arith.truncf %9 : vector<8x256xf32> to vector<8x256xbf16>
    %cst_9 = arith.constant dense<0.000000e+00> : vector<64x256xf32>
    %12 = tpu.matmul %10, %11, %cst_9 {dimension_numbers = #tpu.dot_dimension_numbers<[1], [0], [0], [1], [0, 0, 1, 1], [], []>} : vector<64x8xbf16>, vector<8x256xbf16>, vector<64x256xf32> -> vector<64x256xf32>
    %c0_10 = arith.constant 0 : index
    %c0_11 = arith.constant 0 : index
    %13 = vector.load %arg6[%c0_10, %c0_11] : memref<64x1xf32, #tpu.memory_space<vmem>>, vector<64x1xf32>
    %14 = vector.broadcast %13 : vector<64x1xf32> to vector<64x256xf32>
    %15 = arith.addf %12, %14 : vector<64x256xf32>
    %cst_12 = arith.constant 0.000000e+00 : f32
    %16 = vector.broadcast %cst_12 : f32 to vector<64x256xf32>
    %17 = arith.subf %16, %15 : vector<64x256xf32>
    %18 = math.exp %17 : vector<64x256xf32>
    %cst_13 = arith.constant 1.000000e+00 : f32
    %19 = vector.broadcast %cst_13 : f32 to vector<64x256xf32>
    %20 = arith.addf %19, %18 : vector<64x256xf32>
    %21 = tpu.reciprocal %20 {approx = true} : vector<64x256xf32> -> vector<64x256xf32>
    %22 = arith.mulf %1, %21 : vector<64x256xf32>
    %c0_14 = arith.constant 0 : index
    %c0_15 = arith.constant 0 : index
    %c0_16 = arith.constant 0 : index
    %23 = vector.load %arg7[%c0_14, %c0_15, %c0_16] : memref<1x64x256xf32, #tpu.memory_space<vmem>>, vector<1x64x256xf32>
    %24 = vector.shape_cast %23 : vector<1x64x256xf32> to vector<64x256xf32>
    %25 = vector.shape_cast %22 : vector<64x256xf32> to vector<1x64x256xf32>
    tpu.vector_store %arg7[%c0_14, %c0_15, %c0_16], %25 {strides = array<i32>} : memref<1x64x256xf32, #tpu.memory_space<vmem>>, vector<1x64x256xf32>,
    return
  }
  func.func @transform_0(%arg0: i32, %arg1: i32) -> (i32, i32, i32) {
    %c0_i32 = arith.constant 0 : i32
    %c0_i32_0 = arith.constant 0 : i32
    return %arg0, %c0_i32, %arg1 : i32, i32, i32
  }
  func.func @transform_1(%arg0: i32, %arg1: i32) -> (i32, i32) {
    %c0_i32 = arith.constant 0 : i32
    %c0_i32_0 = arith.constant 0 : i32
    %c0_i32_1 = arith.constant 0 : i32
    return %c0_i32, %c0_i32_0 : i32, i32
  }
  func.func @transform_2(%arg0: i32, %arg1: i32) -> (i32, i32) {
    %c0_i32 = arith.constant 0 : i32
    %c0_i32_0 = arith.constant 0 : i32
    %c0_i32_1 = arith.constant 0 : i32
    return %c0_i32, %c0_i32_0 : i32, i32
  }
  func.func @transform_3(%arg0: i32, %arg1: i32) -> (i32, i32) {
    %c0_i32 = arith.constant 0 : i32
    %c0_i32_0 = arith.constant 0 : i32
    %c0_i32_1 = arith.constant 0 : i32
    return %c0_i32, %c0_i32_0 : i32, i32
  }
  func.func @transform_4(%arg0: i32, %arg1: i32) -> (i32, i32) {
    %c0_i32 = arith.constant 0 : i32
    %c0_i32_0 = arith.constant 0 : i32
    %c0_i32_1 = arith.constant 0 : i32
    return %c0_i32, %c0_i32_0 : i32, i32
  }
  func.func @transform_5(%arg0: i32, %arg1: i32) -> (i32, i32, i32) {
    %c0_i32 = arith.constant 0 : i32
    %c0_i32_0 = arith.constant 0 : i32
    return %arg0, %c0_i32, %arg1 : i32, i32, i32
  }
}

</mosaic_0001>

<llo_original>
// kernel: tpu_custom_call.1
$region0: #{tpu_custom_call.1}
  #allocation0 [shape = 'u32[]', space=smem, size = 0x4, offset = 0x4, fixed_abs, tag = 'smem constant byte address 0x4 - core index']
  #allocation1 [shape = 'u32[144,128]{1,0:T(1,128)}', space=vmem, size = 0x12000, scoped, tag = 'internal scratch']
  %s0 = inlined_call_operand.hbm [shape: f32[2,64,256], index: 0, kind: input, shape index: {}]
  %s1 = inlined_call_operand.vmem [shape: bf16[8,64], index: 1, kind: input, shape index: {}]
  %s2 = inlined_call_operand.vmem [shape: f32[8,1], index: 2, kind: input, shape index: {}]
  %s3 = inlined_call_operand.vmem [shape: bf16[64,8], index: 3, kind: input, shape index: {}]
  %s4 = inlined_call_operand.vmem [shape: f32[64,1], index: 4, kind: input, shape index: {}]
  %s5 = inlined_call_operand.hbm [shape: f32[2,64,256], index: 5, kind: output, shape index: {}]
  %s6 = sld [smem:[#allocation0]]
  $region57: #{tpu_custom_call.1} parent=0
    _
  %s8 = ssub.s32 1, %s6
  %s9 = scalar_select 0, %s8, %s6
  $region1: #{tpu_custom_call.1} parent=0
    #allocation2 [shape = 'u8[131072]{0}', space=vmem, size = 0x20000, scoped, tag = 'input window, operand 0']
    #allocation3 [shape = 's32[2]{0}', space=sflag, size = 0x8, scoped, tag = 'scoped memory for tpu_custom_call.1']
    #allocation4 [shape = 's32[2]{0}', space=sflag, size = 0x8, scoped, tag = 'scoped memory for tpu_custom_call.1']
    #allocation5 [shape = 'u8[131072]{0}', space=vmem, size = 0x20000, scoped, tag = 'output window, operand 0']
    %10 = vsyncpa [#allocation3], 0
    %s11 = scalar_lea.sflag [#allocation3], 1
    %12 = vsyncpa %s11, 0
    %13 = vsyncpa [#allocation4], 0
    %s14 = scalar_lea.sflag [#allocation4], 1
    %15 = vsyncpa %s14, 0
    loop: start=0, step=1, limit=4
    $region2: #{tpu_custom_call.1} parent=1 // loop_pre_header
      _
    $region3: #{tpu_custom_call.1} parent=1 // loop_header
      %s17 = sphi 0, %s21
      %p18 = scmp.ge.s32.totalorder %s17, 4
      %s24 = sphi 0, %s36
      %s25 = sphi 0, %s32
      %s26 = sphi 0, %s24
      %s27 = sphi 0, %s25
      %s28 = sphi 0, %s26
      %s29 = sphi 0, %s27
      %s41 = sphi 0, %s43
      %s44 = sphi 0, %s41
      %s45 = sphi 0, %s44
      %s61 = sphi 0, %s45
      %s65 = sphi 0, %s65
      %s67 = sphi 0, %s65
      %s68 = sphi 0, %s67
      %s82 = sphi 0, %s68
      %s86 = sphi 0, %s86
      %s88 = sphi 0, %s86
      %s89 = sphi 0, %s88
      %s103 = sphi 0, %s89
      %s107 = sphi 0, %s107
      %s109 = sphi 0, %s107
      %s110 = sphi 0, %s109
      %s124 = sphi 0, %s110
      %s128 = sphi 0, %s128
      %s130 = sphi 0, %s128
      %s131 = sphi 0, %s130
      %s145 = sphi 0, %s131
      %s153 = sphi 0, %s155
      %s156 = sphi 0, %s153
      %s157 = sphi 0, %s156
      %s173 = sphi 0, %s157
    $region4: #{tpu_custom_call.1} parent=1 // loop_header_branch
      %20 = sbr.rel (%p18) target = $region8
    $region5: #{tpu_custom_call.1} parent=1 // loop_body
      %s22 = ssub.s32 %s17, 1
      %s23 = ssub.s32 %s17, 2
      %s30 = sadd.s32 1, %s25
      %p31 = scmp.ge.s32.totalorder %s30, 1
      %s32 = scalar_select %p31, 0, %s30
      %s33 = sadd.s32 1, %s24
      %s34 = scalar_select %p31, %s33, %s24
      %p35 = scmp.ge.s32.totalorder %s34, 2
      %s36 = scalar_select %p35, 0, %s34
      %s37 = ssub.s32 %s24, %s36
      %s38 = ssub.s32 %s25, %s32
      %s39 = sor.u32 %s37, %s38
      %p40 = scmp.eq.s32.totalorder %s39, 0
      %s42 = sadd.s32 %s41, 1
      %s43 = scalar_select %p40, %s41, %s42
      %p46 = pneg %p40
      %p47 = scmp.eq.s32.totalorder %s17, 1
      %p48 = por %p46, %p47
      %p49 = scmp.ne.s32.totalorder %s41, %s44
      %p50 = scmp.eq.s32.totalorder %s17, 0
      %p51 = por %p49, %p50
      %p52 = scmp.ne.s32.totalorder %s41, %s44
      %p53 = scmp.eq.s32.totalorder %s22, 1
      %p54 = por %p52, %p53
      %p55 = scmp.ne.s32.totalorder %s44, %s45
      %p56 = scmp.eq.s32.totalorder %s22, 0
      %p57 = por %p55, %p56
      %p58 = scmp.ne.s32.totalorder %s44, %s45
      %p59 = scmp.eq.s32.totalorder %s23, 1
      %p60 = por %p58, %p59
      %p62 = scmp.ne.s32.totalorder %s45, %s61
      %p63 = scmp.eq.s32.totalorder %s23, 0
      %p64 = por %p62, %p63
      %s66 = sadd.s32 %s65, 1
      %p69 = scmp.eq.s32.totalorder %s17, 1
      %p70 = scmp.ne.s32.totalorder %s65, %s67
      %p71 = scmp.eq.s32.totalorder %s17, 0
      %p72 = por %p70, %p71
      %p73 = scmp.ne.s32.totalorder %s65, %s67
      %p74 = scmp.eq.s32.totalorder %s22, 1
      %p75 = por %p73, %p74
      %p76 = scmp.ne.s32.totalorder %s67, %s68
      %p77 = scmp.eq.s32.totalorder %s22, 0
      %p78 = por %p76, %p77
      %p79 = scmp.ne.s32.totalorder %s67, %s68
      %p80 = scmp.eq.s32.totalorder %s23, 1
      %p81 = por %p79, %p80
      %p83 = scmp.ne.s32.totalorder %s68, %s82
      %p84 = scmp.eq.s32.totalorder %s23, 0
      %p85 = por %p83, %p84
      %s87 = sadd.s32 %s86, 1
      %p90 = scmp.eq.s32.totalorder %s17, 1
      %p91 = scmp.ne.s32.totalorder %s86, %s88
      %p92 = scmp.eq.s32.totalorder %s17, 0
      %p93 = por %p91, %p92
      %p94 = scmp.ne.s32.totalorder %s86, %s88
      %p95 = scmp.eq.s32.totalorder %s22, 1
      %p96 = por %p94, %p95
      %p97 = scmp.ne.s32.totalorder %s88, %s89
      %p98 = scmp.eq.s32.totalorder %s22, 0
      %p99 = por %p97, %p98
      %p100 = scmp.ne.s32.totalorder %s88, %s89
      %p101 = scmp.eq.s32.totalorder %s23, 1
      %p102 = por %p100, %p101
      %p104 = scmp.ne.s32.totalorder %s89, %s103
      %p105 = scmp.eq.s32.totalorder %s23, 0
      %p106 = por %p104, %p105
      %s108 = sadd.s32 %s107, 1
      %p111 = scmp.eq.s32.totalorder %s17, 1
      %p112 = scmp.ne.s32.totalorder %s107, %s109
      %p113 = scmp.eq.s32.totalorder %s17, 0
      %p114 = por %p112, %p113
      %p115 = scmp.ne.s32.totalorder %s107, %s109
      %p116 = scmp.eq.s32.totalorder %s22, 1
      %p117 = por %p115, %p116
      %p118 = scmp.ne.s32.totalorder %s109, %s110
      %p119 = scmp.eq.s32.totalorder %s22, 0
      %p120 = por %p118, %p119
      %p121 = scmp.ne.s32.totalorder %s109, %s110
      %p122 = scmp.eq.s32.totalorder %s23, 1
      %p123 = por %p121, %p122
      %p125 = scmp.ne.s32.totalorder %s110, %s124
      %p126 = scmp.eq.s32.totalorder %s23, 0
      %p127 = por %p125, %p126
      %s129 = sadd.s32 %s128, 1
      %p132 = scmp.eq.s32.totalorder %s17, 1
      %p133 = scmp.ne.s32.totalorder %s128, %s130
      %p134 = scmp.eq.s32.totalorder %s17, 0
      %p135 = por %p133, %p134
      %p136 = scmp.ne.s32.totalorder %s128, %s130
      %p137 = scmp.eq.s32.totalorder %s22, 1
      %p138 = por %p136, %p137
      %p139 = scmp.ne.s32.totalorder %s130, %s131
      %p140 = scmp.eq.s32.totalorder %s22, 0
      %p141 = por %p139, %p140
      %p142 = scmp.ne.s32.totalorder %s130, %s131
      %p143 = scmp.eq.s32.totalorder %s23, 1
      %p144 = por %p142, %p143
      %p146 = scmp.ne.s32.totalorder %s131, %s145
      %p147 = scmp.eq.s32.totalorder %s23, 0
      %p148 = por %p146, %p147
      %s149 = ssub.s32 %s24, %s36
      %s150 = ssub.s32 %s25, %s32
      %s151 = sor.u32 %s149, %s150
      %p152 = scmp.eq.s32.totalorder %s151, 0
      %s154 = sadd.s32 %s153, 1
      %s155 = scalar_select %p152, %s153, %s154
      %p158 = pneg %p152
      %p159 = scmp.eq.s32.totalorder %s17, 1
      %p160 = por %p158, %p159
      %p161 = scmp.ne.s32.totalorder %s153, %s156
      %p162 = scmp.eq.s32.totalorder %s17, 0
      %p163 = por %p161, %p162
      %p164 = scmp.ne.s32.totalorder %s153, %s156
      %p165 = scmp.eq.s32.totalorder %s22, 1
      %p166 = por %p164, %p165
      %p167 = scmp.ne.s32.totalorder %s156, %s157
      %p168 = scmp.eq.s32.totalorder %s22, 0
      %p169 = por %p167, %p168
      %p170 = scmp.ne.s32.totalorder %s156, %s157
      %p171 = scmp.eq.s32.totalorder %s23, 1
      %p172 = por %p170, %p171
      %p174 = scmp.ne.s32.totalorder %s157, %s173
      %p175 = scmp.eq.s32.totalorder %s23, 0
      %p176 = por %p174, %p175
      %p177 = scmp.le.s32.totalorder 1, %s17
      %p178 = scmp.lt.s32.totalorder %s17, 3
      %p179 = pnand %p177, %p178
      %p180 = pneg %p179
      // Predicated region
      $region9: #{tpu_custom_call.1} parent=5 // pred_check
        _
      $region10: #{tpu_custom_call.1} parent=5 // pred_check_branch
        %182 = sbr.rel (%p179) target = $region12
      $region11: #{tpu_custom_call.1} parent=5 // pred_region
        %s183 = ssub.s32 %s17, 1
        // Predicated region
        $region13: #{tpu_custom_call.1} parent=11 // pred_check
          %p184 = pneg %p78
        $region14: #{tpu_custom_call.1} parent=11 // pred_check_branch
          %186 = sbr.rel (%p184) target = $region16
        $region15: #{tpu_custom_call.1} parent=11 // pred_region
          _
        $region16: #{tpu_custom_call.1} parent=11 // pred_fallthru
          _
        // Predicated region
        $region17: #{tpu_custom_call.1} parent=11 // pred_check
          %p187 = pneg %p99
        $region18: #{tpu_custom_call.1} parent=11 // pred_check_branch
          %189 = sbr.rel (%p187) target = $region20
        $region19: #{tpu_custom_call.1} parent=11 // pred_region
          _
        $region20: #{tpu_custom_call.1} parent=11 // pred_fallthru
          _
        // Predicated region
        $region21: #{tpu_custom_call.1} parent=11 // pred_check
          %p190 = pneg %p120
        $region22: #{tpu_custom_call.1} parent=11 // pred_check_branch
          %192 = sbr.rel (%p190) target = $region24
        $region23: #{tpu_custom_call.1} parent=11 // pred_region
          _
        $region24: #{tpu_custom_call.1} parent=11 // pred_fallthru
          _
        // Predicated region
        $region25: #{tpu_custom_call.1} parent=11 // pred_check
          %p193 = pneg %p141
        $region26: #{tpu_custom_call.1} parent=11 // pred_check_branch
          %195 = sbr.rel (%p193) target = $region28
        $region27: #{tpu_custom_call.1} parent=11 // pred_region
          _
        $region28: #{tpu_custom_call.1} parent=11 // pred_fallthru
          _
      $region12: #{tpu_custom_call.1} parent=5 // pred_fallthru
        _
      %p196 = scmp.lt.s32.totalorder %s17, 2
      // Predicated region
      $region29: #{tpu_custom_call.1} parent=5 // pred_check
        %p197 = pneg %p196
      $region30: #{tpu_custom_call.1} parent=5 // pred_check_branch
        %199 = sbr.rel (%p197) target = $region32
      $region31: #{tpu_custom_call.1} parent=5 // pred_region
        // Predicated region
        $region33: #{tpu_custom_call.1} parent=31 // pred_check
          %p200 = pneg %p51
        $region34: #{tpu_custom_call.1} parent=31 // pred_check_branch
          %202 = sbr.rel (%p200) target = $region36
        $region35: #{tpu_custom_call.1} parent=31 // pred_region
          %s203 = sand.u32 %s41, 1
          %s204 = scalar_lea.sflag [#allocation3], %s203
          %s205 = sand.u32 %s41, 1
          %s206 = smul.addr %s205, 128
          %s207 = scalar_lea.vmem [#allocation2], %s206
          %s208 = smul.u32 2, %s25
          %s210 = ssub.s32 2048, 2048
          %211 = vsyncadd %s204, %s210
          %s212 = smul.addr %s24, 16
          %s213 = sadd.s32 %s208, %s212
          %s214 = smul.addr %s213, 128
          %s215 = scalar_lea.hbm %s0, %s214
          %s216 = sshll.u32 %s207, 4
          %s217 = int_to_ptr.vmem [resolvable:$true] %s216
          %222 = dma.hbm_to_vmem [thread:$0]  %s215, 2048, %s217, %s204, 256, 256, 16
        $region36: #{tpu_custom_call.1} parent=31 // pred_fallthru
          _
      $region32: #{tpu_custom_call.1} parent=5 // pred_fallthru
        _
      %p223 = scmp.le.s32.totalorder 1, %s17
      %p224 = scmp.lt.s32.totalorder %s17, 3
      %p225 = pnand %p223, %p224
      %p226 = pneg %p225
      // Predicated region
      $region37: #{tpu_custom_call.1} parent=5 // pred_check
        _
      $region38: #{tpu_custom_call.1} parent=5 // pred_check_branch
        %228 = sbr.rel (%p225) target = $region40
      $region39: #{tpu_custom_call.1} parent=5 // pred_region
        %s229 = ssub.s32 %s17, 1
        %s230 = sand.u32 %s44, 1
        %s231 = scalar_lea.sflag [#allocation3], %s230
        %s232 = sand.u32 %s44, 1
        %s233 = smul.addr %s232, 128
        %s234 = scalar_lea.vmem [#allocation2], %s233
        // Predicated region
        $region41: #{tpu_custom_call.1} parent=39 // pred_check
          %p235 = pneg %p57
        $region42: #{tpu_custom_call.1} parent=39 // pred_check_branch
          %237 = sbr.rel (%p235) target = $region44
        $region43: #{tpu_custom_call.1} parent=39 // pred_region
          %238 = dma.done %s231, 2048
        $region44: #{tpu_custom_call.1} parent=39 // pred_fallthru
          _
        %s239 = sand.u32 %s44, 1
        %s240 = scalar_lea.sflag [#allocation3], %s239
        %s241 = sand.u32 %s44, 1
        %s242 = smul.addr %s241, 128
        %s243 = scalar_lea.vmem [#allocation2], %s242
        %p244 = pneg %p57
        %p245 = pneg %p54
        %p246 = pneg %p78
        %p247 = pneg %p75
        %p248 = pneg %p99
        %p249 = pneg %p96
        %p250 = pneg %p120
        %p251 = pneg %p117
        %p252 = pneg %p141
        %p253 = pneg %p138
        %p254 = pneg %p169
        %p255 = pneg %p166
        %s256 = sand.u32 %s156, 1
        %s257 = scalar_lea.sflag [#allocation4], %s256
        %s258 = sand.u32 %s156, 1
        %s259 = smul.addr %s258, 128
        %s260 = scalar_lea.vmem [#allocation5], %s259
        %s261 = smul.u32 2, %s27
        %s262 = smul.u32 2, %s27
        %v264 = vld [vmem:[%s234] sm:$0xff]
        %v265 = vld [vmem:[%s234 + $0x8] sm:$0xff]
        %v266 = vld [vmem:[%s234 + $0x10] sm:$0xff]
        %v267 = vld [vmem:[%s234 + $0x18] sm:$0xff]
        %v268 = vld [vmem:[%s234 + $0x20] sm:$0xff]
        %v269 = vld [vmem:[%s234 + $0x28] sm:$0xff]
        %v270 = vld [vmem:[%s234 + $0x30] sm:$0xff]
        %v271 = vld [vmem:[%s234 + $0x38] sm:$0xff]
        %v272 = vld [vmem:[%s234 + $0x40] sm:$0xff]
        %v273 = vld [vmem:[%s234 + $0x48] sm:$0xff]
        %v274 = vld [vmem:[%s234 + $0x50] sm:$0xff]
        %v275 = vld [vmem:[%s234 + $0x58] sm:$0xff]
        %v276 = vld [vmem:[%s234 + $0x60] sm:$0xff]
        %v277 = vld [vmem:[%s234 + $0x68] sm:$0xff]
        %v278 = vld [vmem:[%s234 + $0x70] sm:$0xff]
        %v279 = vld [vmem:[%s234 + $0x78] sm:$0xff]
        %v280 = vpack.c.bf16 %v266, %v264
        %v281 = vpack.c.bf16 %v267, %v265
        %v282 = vpack.c.bf16 %v270, %v268
        %v283 = vpack.c.bf16 %v271, %v269
        %v284 = vpack.c.bf16 %v274, %v272
        %v285 = vpack.c.bf16 %v275, %v273
        %v286 = vpack.c.bf16 %v278, %v276
        %v287 = vpack.c.bf16 %v279, %v277
        %v288 = vld [vmem:[%s1] sm:$0xf]
        %v289 = vld [vmem:[%s2] sm:$0xff]
        %291 = vset.pattern.permute.xlu0 0
        %292 = vperm.xlu0 %291, %v289
        %v293 = vpop.permute.xlu0 %292
        %vm295 = vcmask 523264
        %v297 = vsel %vm295, %v288, 0
        %299 = vmatprep.subr.bf16.mxu0 0
        %300 = vmatpush1.bf16.msra.mxu0 0
        %301 = vmatprep.subr.bf16.mxu0 0
        %302 = vmatpush1.bf16.msra.mxu0 0
        %303 = vmatprep.subr.bf16.mxu0 0
        %304 = vmatpush1.bf16.msra.mxu0 0
        %305 = vmatprep.subr.bf16.mxu0 0
        %306 = vmatpush1.bf16.msra.mxu0 0
        %307 = vmatprep.subr.bf16.mxu0 %v287
        %308 = vmatpush1.bf16.msra.mxu0 %v286
        %309 = vmatprep.subr.bf16.mxu0 %v285
        %310 = vmatpush1.bf16.msra.mxu0 %v284
        %311 = vmatprep.subr.bf16.mxu0 %v283
        %312 = vmatpush1.bf16.msra.mxu0 %v282
        %313 = vmatprep.subr.bf16.mxu0 %v281
        %314 = vmatpush1.bf16.msra.mxu0 %v280
        %315 = vmatprep.subr.bf16.mxu0 0
        %316 = vmatpush2.bf16.msra.mxu0 0
        %317 = vmatprep.subr.bf16.mxu0 0
        %318 = vmatpush2.bf16.msra.mxu0 0
        %319 = vmatprep.subr.bf16.mxu0 0
        %320 = vmatpush2.bf16.msra.mxu0 0
        %321 = vmatprep.subr.bf16.mxu0 0
        %322 = vmatpush2.bf16.msra.mxu0 0
        %323 = vmatprep.subr.bf16.mxu0 0
        %324 = vmatpush2.bf16.msra.mxu0 0
        %325 = vmatprep.subr.bf16.mxu0 0
        %326 = vmatpush2.bf16.msra.mxu0 0
        %327 = vmatprep.subr.bf16.mxu0 0
        %328 = vmatpush2.bf16.msra.mxu0 0
        %329 = vmatprep.subr.bf16.mxu0 0
        %330 = vmatpush2.bf16.msra.mxu0 0
        %331 = vmatprep.mubr.bf16.mxu0 0
        %332 = vmatmul.mubr.bf16.gmra.mxu0 %v297
        %v333 = vpop.f32.mrf.mxu0
        %v334 = vadd.f32 %v293, %v333
        %v335 = vpop.f32.mrf.mxu0
        %v336 = vadd.f32 %v293, %v335
        %v337 = vpop.f32.mrf.mxu0
        %v338 = vpop.f32.mrf.mxu0
        %339 = vdwg.mxu0
        %v340 = vmax.f32 %v334, 0.0
        %v341 = vmax.f32 %v336, 0.0
        %v342 = vld [vmem:[%s3] sm:$0xf]
        %v343 = vld [vmem:[%s3 + $0x4] sm:$0xf]
        %v344 = vld [vmem:[%s3 + $0x8] sm:$0xf]
        %v345 = vld [vmem:[%s3 + $0xc] sm:$0xf]
        %v346 = vld [vmem:[%s3 + $0x10] sm:$0xf]
        %v347 = vld [vmem:[%s3 + $0x14] sm:$0xf]
        %v348 = vld [vmem:[%s3 + $0x18] sm:$0xf]
        %v349 = vld [vmem:[%s3 + $0x1c] sm:$0xf]
        %v350 = vpack.c.bf16 %v340, %v340
        %v351 = vpack.c.bf16 %v341, %v341
        %v352 = vld [vmem:[%s4] sm:$0xff]
        %v353 = vld [vmem:[%s4 + $0x8] sm:$0xff]
        %v354 = vld [vmem:[%s4 + $0x10] sm:$0xff]
        %v355 = vld [vmem:[%s4 + $0x18] sm:$0xff]
        %v356 = vld [vmem:[%s4 + $0x20] sm:$0xff]
        %v357 = vld [vmem:[%s4 + $0x28] sm:$0xff]
        %v358 = vld [vmem:[%s4 + $0x30] sm:$0xff]
        %v359 = vld [vmem:[%s4 + $0x38] sm:$0xff]
        %361 = vset.pattern.permute.xlu0 0
        %362 = vperm.xlu0 %361, %v352
        %v363 = vpop.permute.xlu0 %362
        %366 = vset.pattern.permute.xlu0 0
        %367 = vperm.xlu0 %366, %v353
        %v368 = vpop.permute.xlu0 %367
        %371 = vset.pattern.permute.xlu0 0
        %372 = vperm.xlu0 %371, %v354
        %v373 = vpop.permute.xlu0 %372
        %376 = vset.pattern.permute.xlu0 0
        %377 = vperm.xlu0 %376, %v355
        %v378 = vpop.permute.xlu0 %377
        %381 = vset.pattern.permute.xlu0 0
        %382 = vperm.xlu0 %381, %v356
        %v383 = vpop.permute.xlu0 %382
        %386 = vset.pattern.permute.xlu0 0
        %387 = vperm.xlu0 %386, %v357
        %v388 = vpop.permute.xlu0 %387
        %391 = vset.pattern.permute.xlu0 0
        %392 = vperm.xlu0 %391, %v358
        %v393 = vpop.permute.xlu0 %392
        %396 = vset.pattern.permute.xlu0 0
        %397 = vperm.xlu0 %396, %v359
        %v398 = vpop.permute.xlu0 %397
        %v408 = vunpack.c.l.b16 %v342
        %v409 = vunpack.c.l.b16 %v343
        %v410 = vunpack.c.l.b16 %v344
        %v411 = vunpack.c.l.b16 %v345
        %v412 = vunpack.c.l.b16 %v346
        %v413 = vunpack.c.l.b16 %v347
        %v414 = vunpack.c.l.b16 %v348
        %v415 = vunpack.c.l.b16 %v349
        %v416 = vpack.c.b16 %v409, %v408
        %v417 = vpack.c.b16 %v411, %v410
        %v418 = vpack.c.b16 %v413, %v412
        %v419 = vpack.c.b16 %v415, %v414
        %vm420 = vcmask 64512
        %v422 = vsel %vm420, %v416, 0
        %v425 = vsel %vm420, %v417, 0
        %v428 = vsel %vm420, %v418, 0
        %v431 = vsel %vm420, %v419, 0
        %vm433 = vcmask 1043456
        %v435 = vsel %vm433, %v350, 0
        %v438 = vsel %vm433, %v351, 0
        %440 = vmatprep.subr.bf16.mxu0 0
        %441 = vmatpush1.bf16.msra.mxu0 0
        %442 = vmatprep.subr.bf16.mxu0 0
        %443 = vmatpush1.bf16.msra.mxu0 0
        %444 = vmatprep.subr.bf16.mxu0 0
        %445 = vmatpush1.bf16.msra.mxu0 0
        %446 = vmatprep.subr.bf16.mxu0 0
        %447 = vmatpush1.bf16.msra.mxu0 0
        %448 = vmatprep.subr.bf16.mxu0 0
        %449 = vmatpush1.bf16.msra.mxu0 0
        %450 = vmatprep.subr.bf16.mxu0 0
        %451 = vmatpush1.bf16.msra.mxu0 0
        %452 = vmatprep.subr.bf16.mxu0 0
        %453 = vmatpush1.bf16.msra.mxu0 0
        %454 = vmatprep.subr.bf16.mxu0 %v438
        %455 = vmatpush1.bf16.msra.mxu0 %v435
        %456 = vmatprep.subr.bf16.mxu0 0
        %457 = vmatpush2.bf16.msra.mxu0 0
        %458 = vmatprep.subr.bf16.mxu0 0
        %459 = vmatpush2.bf16.msra.mxu0 0
        %460 = vmatprep.subr.bf16.mxu0 0
        %461 = vmatpush2.bf16.msra.mxu0 0
        %462 = vmatprep.subr.bf16.mxu0 0
        %463 = vmatpush2.bf16.msra.mxu0 0
        %464 = vmatprep.subr.bf16.mxu0 0
        %465 = vmatpush2.bf16.msra.mxu0 0
        %466 = vmatprep.subr.bf16.mxu0 0
        %467 = vmatpush2.bf16.msra.mxu0 0
        %468 = vmatprep.subr.bf16.mxu0 0
        %469 = vmatpush2.bf16.msra.mxu0 0
        %470 = vmatprep.subr.bf16.mxu0 0
        %471 = vmatpush2.bf16.msra.mxu0 0
        %472 = vmatprep.mubr.bf16.mxu0 0
        %473 = vmatmul.mubr.bf16.gmra.mxu0 %v422
        %v474 = vpop.f32.mrf.mxu0
        %v475 = vadd.f32 %v363, %v474
        %v476 = vpop.f32.mrf.mxu0
        %v477 = vadd.f32 %v363, %v476
        %v478 = vpop.f32.mrf.mxu0
        %v479 = vadd.f32 %v368, %v478
        %v480 = vpop.f32.mrf.mxu0
        %v481 = vadd.f32 %v368, %v480
        %482 = vmatprep.mubr.bf16.mxu0 0
        %483 = vmatmul.mubr.bf16.gmra.mxu0 %v425
        %v484 = vpop.f32.mrf.mxu0
        %v485 = vadd.f32 %v373, %v484
        %v486 = vpop.f32.mrf.mxu0
        %v487 = vadd.f32 %v373, %v486
        %v488 = vpop.f32.mrf.mxu0
        %v489 = vadd.f32 %v378, %v488
        %v490 = vpop.f32.mrf.mxu0
        %v491 = vadd.f32 %v378, %v490
        %492 = vmatprep.mubr.bf16.mxu0 0
        %493 = vmatmul.mubr.bf16.gmra.mxu0 %v428
        %v494 = vpop.f32.mrf.mxu0
        %v495 = vadd.f32 %v383, %v494
        %v496 = vpop.f32.mrf.mxu0
        %v497 = vadd.f32 %v383, %v496
        %v498 = vpop.f32.mrf.mxu0
        %v499 = vadd.f32 %v388, %v498
        %v500 = vpop.f32.mrf.mxu0
        %v501 = vadd.f32 %v388, %v500
        %502 = vmatprep.mubr.bf16.mxu0 0
        %503 = vmatmul.mubr.bf16.gmra.mxu0 %v431
        %v504 = vpop.f32.mrf.mxu0
        %v505 = vadd.f32 %v393, %v504
        %v506 = vpop.f32.mrf.mxu0
        %v507 = vadd.f32 %v393, %v506
        %v508 = vpop.f32.mrf.mxu0
        %v509 = vadd.f32 %v398, %v508
        %v510 = vpop.f32.mrf.mxu0
        %v511 = vadd.f32 %v398, %v510
        %512 = vdwg.mxu0
        %v513 = vsub.f32 0.0, %v475
        %v514 = vsub.f32 0.0, %v477
        %v515 = vsub.f32 0.0, %v479
        %v516 = vsub.f32 0.0, %v481
        %v517 = vsub.f32 0.0, %v485
        %v518 = vsub.f32 0.0, %v487
        %v519 = vsub.f32 0.0, %v489
        %v520 = vsub.f32 0.0, %v491
        %v521 = vsub.f32 0.0, %v495
        %v522 = vsub.f32 0.0, %v497
        %v523 = vsub.f32 0.0, %v499
        %v524 = vsub.f32 0.0, %v501
        %v525 = vsub.f32 0.0, %v505
        %v526 = vsub.f32 0.0, %v507
        %v527 = vsub.f32 0.0, %v509
        %v528 = vsub.f32 0.0, %v511
        %v529 = vmul.f32 %v513, 1.442695
        %v530 = vpow.pop %v529
        %v531 = vmul.f32 %v514, 1.442695
        %v532 = vpow.pop %v531
        %v533 = vmul.f32 %v515, 1.442695
        %v534 = vpow.pop %v533
        %v535 = vmul.f32 %v516, 1.442695
        %v536 = vpow.pop %v535
        %v537 = vmul.f32 %v517, 1.442695
        %v538 = vpow.pop %v537
        %v539 = vmul.f32 %v518, 1.442695
        %v540 = vpow.pop %v539
        %v541 = vmul.f32 %v519, 1.442695
        %v542 = vpow.pop %v541
        %v543 = vmul.f32 %v520, 1.442695
        %v544 = vpow.pop %v543
        %v545 = vmul.f32 %v521, 1.442695
        %v546 = vpow.pop %v545
        %v547 = vmul.f32 %v522, 1.442695
        %v548 = vpow.pop %v547
        %v549 = vmul.f32 %v523, 1.442695
        %v550 = vpow.pop %v549
        %v551 = vmul.f32 %v524, 1.442695
        %v552 = vpow.pop %v551
        %v553 = vmul.f32 %v525, 1.442695
        %v554 = vpow.pop %v553
        %v555 = vmul.f32 %v526, 1.442695
        %v556 = vpow.pop %v555
        %v557 = vmul.f32 %v527, 1.442695
        %v558 = vpow.pop %v557
        %v559 = vmul.f32 %v528, 1.442695
        %v560 = vpow.pop %v559
        %v561 = vadd.f32 %v530, 1.0
        %v562 = vadd.f32 %v532, 1.0
        %v563 = vadd.f32 %v534, 1.0
        %v564 = vadd.f32 %v536, 1.0
        %v565 = vadd.f32 %v538, 1.0
        %v566 = vadd.f32 %v540, 1.0
        %v567 = vadd.f32 %v542, 1.0
        %v568 = vadd.f32 %v544, 1.0
        %v569 = vadd.f32 %v546, 1.0
        %v570 = vadd.f32 %v548, 1.0
        %v571 = vadd.f32 %v550, 1.0
        %v572 = vadd.f32 %v552, 1.0
        %v573 = vadd.f32 %v554, 1.0
        %v574 = vadd.f32 %v556, 1.0
        %v575 = vadd.f32 %v558, 1.0
        %v576 = vadd.f32 %v560, 1.0
        %v577 = vrcp.pop %v561
        %v578 = vrcp.pop %v562
        %v579 = vrcp.pop %v563
        %v580 = vrcp.pop %v564
        %v581 = vrcp.pop %v565
        %v582 = vrcp.pop %v566
        %v583 = vrcp.pop %v567
        %v584 = vrcp.pop %v568
        %v585 = vrcp.pop %v569
        %v586 = vrcp.pop %v570
        %v587 = vrcp.pop %v571
        %v588 = vrcp.pop %v572
        %v589 = vrcp.pop %v573
        %v590 = vrcp.pop %v574
        %v591 = vrcp.pop %v575
        %v592 = vrcp.pop %v576
        %v593 = vmul.f32 %v264, %v577
        %v594 = vmul.f32 %v265, %v578
        %v595 = vmul.f32 %v266, %v579
        %v596 = vmul.f32 %v267, %v580
        %v597 = vmul.f32 %v268, %v581
        %v598 = vmul.f32 %v269, %v582
        %v599 = vmul.f32 %v270, %v583
        %v600 = vmul.f32 %v271, %v584
        %v601 = vmul.f32 %v272, %v585
        %v602 = vmul.f32 %v273, %v586
        %v603 = vmul.f32 %v274, %v587
        %v604 = vmul.f32 %v275, %v588
        %v605 = vmul.f32 %v276, %v589
        %v606 = vmul.f32 %v277, %v590
        %v607 = vmul.f32 %v278, %v591
        %v608 = vmul.f32 %v279, %v592
        %609 = vst [vmem:[%s260] sm:$0xff] %v593
        %610 = vst [vmem:[%s260 + $0x8] sm:$0xff] %v594
        %611 = vst [vmem:[%s260 + $0x10] sm:$0xff] %v595
        %612 = vst [vmem:[%s260 + $0x18] sm:$0xff] %v596
        %613 = vst [vmem:[%s260 + $0x20] sm:$0xff] %v597
        %614 = vst [vmem:[%s260 + $0x28] sm:$0xff] %v598
        %615 = vst [vmem:[%s260 + $0x30] sm:$0xff] %v599
        %616 = vst [vmem:[%s260 + $0x38] sm:$0xff] %v600
        %617 = vst [vmem:[%s260 + $0x40] sm:$0xff] %v601
        %618 = vst [vmem:[%s260 + $0x48] sm:$0xff] %v602
        %619 = vst [vmem:[%s260 + $0x50] sm:$0xff] %v603
        %620 = vst [vmem:[%s260 + $0x58] sm:$0xff] %v604
        %621 = vst [vmem:[%s260 + $0x60] sm:$0xff] %v605
        %622 = vst [vmem:[%s260 + $0x68] sm:$0xff] %v606
        %623 = vst [vmem:[%s260 + $0x70] sm:$0xff] %v607
        %624 = vst [vmem:[%s260 + $0x78] sm:$0xff] %v608
        %s625 = sand.u32 %s156, 1
        %s626 = scalar_lea.sflag [#allocation4], %s625
        %s627 = sand.u32 %s156, 1
        %s628 = smul.addr %s627, 128
        %s629 = scalar_lea.vmem [#allocation5], %s628
        // Predicated region
        $region45: #{tpu_custom_call.1} parent=39 // pred_check
          %p630 = pneg %p166
        $region46: #{tpu_custom_call.1} parent=39 // pred_check_branch
          %632 = sbr.rel (%p630) target = $region48
        $region47: #{tpu_custom_call.1} parent=39 // pred_region
          %s633 = smul.u32 2, %s27
          %s635 = ssub.s32 2048, 2048
          %636 = vsyncadd %s626, %s635
          %s637 = smul.addr %s26, 16
          %s638 = sadd.s32 %s633, %s637
          %s639 = smul.addr %s638, 128
          %s640 = scalar_lea.hbm %s5, %s639
          %s641 = sshll.u32 %s629, 4
          %s642 = int_to_ptr.vmem [resolvable:$true] %s641
          %647 = dma.vmem_to_hbm [thread:$0]  %s642, 2048, %s640, %s626, 256, 256, 16
        $region48: #{tpu_custom_call.1} parent=39 // pred_fallthru
          _
      $region40: #{tpu_custom_call.1} parent=5 // pred_fallthru
        _
      %p648 = scmp.le.s32.totalorder 2, %s17
      // Predicated region
      $region49: #{tpu_custom_call.1} parent=5 // pred_check
        %p649 = pneg %p648
      $region50: #{tpu_custom_call.1} parent=5 // pred_check_branch
        %651 = sbr.rel (%p649) target = $region52
      $region51: #{tpu_custom_call.1} parent=5 // pred_region
        %s652 = ssub.s32 %s17, 2
        // Predicated region
        $region53: #{tpu_custom_call.1} parent=51 // pred_check
          %p653 = pneg %p172
        $region54: #{tpu_custom_call.1} parent=51 // pred_check_branch
          %655 = sbr.rel (%p653) target = $region56
        $region55: #{tpu_custom_call.1} parent=51 // pred_region
          %s656 = sand.u32 %s157, 1
          %s657 = scalar_lea.sflag [#allocation4], %s656
          %s658 = sand.u32 %s157, 1
          %s659 = smul.addr %s658, 128
          %s660 = scalar_lea.vmem [#allocation5], %s659
          %661 = dma.done %s657, 2048
        $region56: #{tpu_custom_call.1} parent=51 // pred_fallthru
          _
      $region52: #{tpu_custom_call.1} parent=5 // pred_fallthru
        _
    $region6: #{tpu_custom_call.1} parent=1 // loop_footer
      %s21 = sadd.s32 1, %s17
    $region7: #{tpu_custom_call.1} parent=1 // loop_footer_branch
      %16 = sbr.rel target = $region3
    $region8: #{tpu_custom_call.1} parent=1 // loop_exit
      _
    %662 = vsyncpa [#allocation3], 1
    %s663 = scalar_lea.sflag [#allocation3], 1
    %664 = vsyncpa %s663, 1
    %665 = vsyncpa [#allocation4], 1
    %s666 = scalar_lea.sflag [#allocation4], 1
    %667 = vsyncpa %s666, 1

</llo_original>
